<compile_context>
chip_gen: v5e
topology: v5e:2x2
jax: 0.10.0
libtpu: 0.0.40
codegen_flags: <defaults>
</compile_context>

<pallas_src>
import functools

import jax
import jax.numpy as jnp
from jax.experimental import pallas as pl
from jax.experimental.pallas import tpu as pltpu


_VMEM_WORKING_SET_BUDGET = 12 * 1024 * 1024   # honest padded-f32 budget per grid step
_VMEM_LIMIT_BYTES = 32 * 1024 * 1024          # scoped-VMEM limit, safe on v5e/v6e/v7x
_MAX_TILE_ROWS = 1024                         # cap chosen for v7x's 64 MiB VMEM per TC


def _num_tensorcores():
    """Best-effort TensorCores-per-chip (2 on v7x, 1 on v5e/v6e)."""
    try:
        dev = jax.devices()[0]
        if dev.platform != "tpu":
            return 1
        kind = str(getattr(dev, "device_kind", "")).lower()
        if "v7" in kind or "7x" in kind:
            return 2
    except Exception:
        pass
    return 1


def _choose_tile_rows(n_rows, n_classes, itemsize):
    """Pick a batch tile whose *padded f32* working set fits the VMEM budget."""
    c_pad = ((n_classes + 127) // 128) * 128
    bytes_per_row = (
        2 * c_pad * itemsize    # logits block, storage dtype, double-buffered
        + 2 * 128 * 4           # (T, 1) int32 targets block pads to 128 lanes, x2 bufs
        + 5 * c_pad * 4         # live f32 (T, C_pad) temporaries (cast/shifted/exp/iota/select)
        + 8 * 128 * 4           # (T, 1) f32 per-row temporaries (m, s, ce, pt, w, ...) pad to 128 lanes
    )
    rows = _VMEM_WORKING_SET_BUDGET // max(1, bytes_per_row)
    rows = max(8, (rows // 8) * 8)
    rows = min(rows, _MAX_TILE_ROWS)
    if rows >= n_rows:
        return n_rows   # single full-batch tile (block == full array dim is always legal)
    return rows


def _row_focal(logits, targets, alpha, gamma):
    """Per-row focal loss for a (T, C) logits tile and (T, 1) int32 targets tile."""
    # f32 compute regardless of storage dtype (bf16 logits halve HBM traffic; v5e has
    # no bf16 VPU/EUP paths so the math stays f32).
    logits = logits.astype(jnp.float32)

    m = jnp.max(logits, axis=-1, keepdims=True)                     # (T, 1)
    shifted = logits - m                                            # (T, C)
    s = jnp.sum(jnp.exp(shifted), axis=-1, keepdims=True)           # (T, 1)

    # Target column via a single select + lane reduce: no one-hot int->f32 convert,
    # no (T, C) multiply, no second cross-lane reduce.
    # TODO(synk): out-of-range targets (e.g. ignore_index=-100) are not validated;
    # PyTorch's F.cross_entropy would raise for them.
    col = jax.lax.broadcasted_iota(jnp.int32, logits.shape, 1)      # (T, C)
    shifted_t = jnp.sum(jnp.where(col == targets, shifted, 0.0),
                        axis=-1, keepdims=True)                     # (T, 1)

    ce = jnp.log(s) - shifted_t                                     # -log p(target)
    pt = jnp.exp(-ce)                                               # exact: matches torch.exp(-ce)
    w = jnp.maximum(1.0 - pt, 0.0)   # clamp fp rounding so pow never sees a negative base

    g = float(gamma)
    if g.is_integer():               # integer gamma: repeated multiply, no exp/log chain
        weight = jnp.ones_like(w)
        for _ in range(int(g)):
            weight = weight * w
    else:
        weight = w ** g
    return alpha * weight * ce                                      # (T, 1)


def _focal_sum_kernel(logits_ref, targets_ref, out_ref, *,
                      alpha, gamma, n_rows, tile_rows, tiles_per_partial, needs_mask):
    p = pl.program_id(0)   # partial-sum index ("parallel" -> per-TensorCore on v7x)
    t = pl.program_id(1)   # tile index within this partial ("arbitrary" reduction axis)

    @pl.when(t == 0)
    def _init():
        # (1, 8, 128) accumulator = exactly one vreg, resident across the whole t axis;
        # it is only written back to HBM when the partial index changes.
        out_ref[...] = jnp.zeros_like(out_ref)

    focal = _row_focal(logits_ref[...], targets_ref[...], alpha, gamma)   # (T, 1)

    if needs_mask:
        # Zero rows past N (tail of the last tile and clamped duplicate tiles).
        # Keep this a select (not a multiply) so garbage rows can never inject NaN/Inf.
        tile_idx = p * tiles_per_partial + t
        row = tile_idx * tile_rows + jax.lax.broadcasted_iota(jnp.int32, focal.shape, 0)
        focal = jnp.where(row < n_rows, focal, 0.0)

    out_ref[...] += jnp.sum(focal, axis=0, keepdims=True)


def _focal_none_kernel(logits_ref, targets_ref, out_ref, *, alpha, gamma):
    # TODO(synk): a lane-dense (1, tile_rows) output block would avoid masked vst.msk
    # partial stores, but needs a sublane->lane relayout of the (T, 1) loss vector;
    # output bytes are << input bytes here so the simple layout is kept.
    out_ref[...] = _row_focal(logits_ref[...], targets_ref[...], alpha, gamma)


def focal_loss(logits, targets, alpha=1.0, gamma=2, reduction="mean", tile_rows=None):
    """Pallas TPU focal loss.

    logits: (N, C) float (f32 or bf16), targets: (N,) integer class indices.
    reduction 'mean' / 'sum' -> f32 scalar; anything else (PyTorch 'none' behaviour)
    -> (N,) f32 per-sample losses.
    """
    n, c = logits.shape
    targets2d = targets.astype(jnp.int32).reshape(n, 1)

    if tile_rows is None:
        tile_rows = _choose_tile_rows(n, c, logits.dtype.itemsize)
    else:
        tile_rows = int(tile_rows)
        tile_rows = n if tile_rows >= n else max(8, (tile_rows // 8) * 8)
    num_tiles = pl.cdiv(n, tile_rows)

    in_bytes = n * c * logits.dtype.itemsize + n * 4
    flops = 8 * n * c
    transcendentals = n * c + 2 * n

    if reduction not in ("mean", "sum"):
        # PyTorch module falls through to returning per-sample losses.
        out = pl.pallas_call(
            functools.partial(_focal_none_kernel, alpha=float(alpha), gamma=gamma),
            out_shape=jax.ShapeDtypeStruct((n, 1), jnp.float32),
            grid_spec=pltpu.PrefetchScalarGridSpec(
                num_scalar_prefetch=0,
                grid=(num_tiles,),
                in_specs=[
                    pl.BlockSpec((tile_rows, c), lambda i: (i, 0)),
                    pl.BlockSpec((tile_rows, 1), lambda i: (i, 0)),
                ],
                out_specs=pl.BlockSpec((tile_rows, 1), lambda i: (i, 0)),
            ),
            compiler_params=pltpu.CompilerParams(
                dimension_semantics=("parallel",),
                vmem_limit_bytes=_VMEM_LIMIT_BYTES),
            cost_estimate=pl.CostEstimate(
                flops=flops, transcendentals=transcendentals,
                bytes_accessed=in_bytes + n * 4),
        )(logits, targets2d)
        return out.reshape(n)

    # Scalar reductions: stream batch tiles; the inner "arbitrary" axis accumulates into
    # a one-vreg VMEM-resident output block, the outer "parallel" axis emits per-core
    # partial sums so v7x's two TensorCores can split the batch.  Single-core chips
    # (v5e/v6e) use one partial: no duplicated clamped tile, no extra writeback.
    # TODO(synk): verify with a trace whether plain "parallel" shards across v7x's two
    # TensorCores or whether pltpu.CORE_PARALLEL is required on that axis.
    partials = _num_tensorcores() if num_tiles >= 2 else 1
    tiles_per_partial = pl.cdiv(num_tiles, partials)
    needs_mask = (partials * tiles_per_partial * tile_rows) != n
    last_tile = num_tiles - 1

    def in_index(p, t):
        # Clamp so duplicated trailing tiles (when partials don't divide num_tiles)
        # stay in bounds; their rows are masked off inside the kernel.
        return (jnp.minimum(p * tiles_per_partial + t, last_tile), 0)

    kernel = functools.partial(
        _focal_sum_kernel,
        alpha=float(alpha), gamma=gamma, n_rows=n, tile_rows=tile_rows,
        tiles_per_partial=tiles_per_partial, needs_mask=needs_mask)

    out = pl.pallas_call(
        kernel,
        out_shape=jax.ShapeDtypeStruct((partials, 8, 128), jnp.float32),
        grid_spec=pltpu.PrefetchScalarGridSpec(
            num_scalar_prefetch=0,
            grid=(partials, tiles_per_partial),
            in_specs=[
                pl.BlockSpec((tile_rows, c), in_index),
                pl.BlockSpec((tile_rows, 1), in_index),
            ],
            # One lane-dense vreg per partial, written back once per partial.
            out_specs=pl.BlockSpec((1, 8, 128), lambda p, t: (p, 0, 0)),
        ),
        compiler_params=pltpu.CompilerParams(
            dimension_semantics=("parallel", "arbitrary"),
            vmem_limit_bytes=_VMEM_LIMIT_BYTES),
        cost_estimate=pl.CostEstimate(
            flops=flops, transcendentals=transcendentals,
            bytes_accessed=in_bytes + partials * 8 * 128 * 4),
    )(logits, targets2d)

    total = jnp.sum(out[:, 0, 0])
    if reduction == "sum":
        return total
    return total * jnp.float32(1.0 / n)   # mean: trace-time 1/N multiply


def focal_loss_ref(logits, targets, alpha=1.0, gamma=2, reduction="mean"):
    # Pure-JAX reference mirroring the PyTorch module.
    logp = jax.nn.log_softmax(logits.astype(jnp.float32), axis=-1)
    ce = -jnp.take_along_axis(logp, targets[:, None], axis=-1)[:, 0]
    pt = jnp.exp(-ce)
    focal = alpha * (1.0 - pt) ** gamma * ce
    if reduction == "mean":
        return jnp.mean(focal)
    if reduction == "sum":
        return jnp.sum(focal)
    return focal


if __name__ == "__main__":
    key = jax.random.PRNGKey(0)
    k1, k2, k3, k4 = jax.random.split(key, 4)

    # Small classifier-head shapes: batch=8, classes=32 (single-tile path).
    N, C = 8, 32
    logits = jax.random.normal(k1, (N, C), dtype=jnp.float32)
    targets = jax.random.randint(k2, (N,), 0, C, dtype=jnp.int32)

    loss = jax.block_until_ready(focal_loss(logits, targets, alpha=1.0, gamma=2))
    ref = focal_loss_ref(logits, targets)
    assert jnp.allclose(loss, ref, rtol=2e-3, atol=1e-3), (loss, ref)

    # Exercise the tiled / masked / multi-tile accumulation path at small shapes
    # (N=20 with 8-row tiles -> 3 tiles, masked tail; on v7x also 2 partials + clamp).
    N2, C2 = 20, 32
    logits2 = jax.random.normal(k3, (N2, C2), dtype=jnp.float32)
    targets2 = jax.random.randint(k4, (N2,), 0, C2, dtype=jnp.int32)

    loss2 = jax.block_until_ready(
        focal_loss(logits2, targets2, reduction="mean", tile_rows=8))
    ref2 = focal_loss_ref(logits2, targets2, reduction="mean")
    assert jnp.allclose(loss2, ref2, rtol=2e-3, atol=1e-3), (loss2, ref2)

    loss2s = jax.block_until_ready(
        focal_loss(logits2, targets2, reduction="sum", tile_rows=8))
    ref2s = focal_loss_ref(logits2, targets2, reduction="sum")
    assert jnp.allclose(loss2s, ref2s, rtol=2e-3, atol=1e-3), (loss2s, ref2s)

    # 'none' reduction returns per-sample losses (PyTorch fall-through behaviour).
    per_sample = jax.block_until_ready(
        focal_loss(logits2, targets2, reduction="none", tile_rows=8))
    ref_none = focal_loss_ref(logits2, targets2, reduction="none")
    assert per_sample.shape == (N2,)
    assert jnp.allclose(per_sample, ref_none, rtol=2e-3, atol=1e-3), (per_sample, ref_none)

    print("KERNEL_OK")
</pallas_src>

<mosaic_0001>
module attributes {stable_mosaic.version = 11 : i64} {
  func.func @_focal_sum_kernel(%arg0: i32, %arg1: i32, %arg2: memref<8x32xf32, #tpu.memory_space<vmem>>, %arg3: memref<8x1xi32, #tpu.memory_space<vmem>>, %arg4: memref<1x8x128xf32, #tpu.memory_space<vmem>>) attributes {dimension_semantics = [#tpu.dimension_semantics<parallel>, #tpu.dimension_semantics<arbitrary>], iteration_bounds = array<i64: 1, 1>, scalar_prefetch = 0 : i64, scratch_operands = 0 : i64, tpu.core_type = #tpu.core_type<tc>, window_params = [{transform_indices = @transform_0, window_bounds = array<i64: 8, 32>}, {transform_indices = @transform_1, window_bounds = array<i64: 8, 1>}, {transform_indices = @transform_2, window_bounds = array<i64: 1, 8, 128>}]} {
    %c0_i32 = arith.constant 0 : i32
    %0 = arith.cmpi eq, %arg1, %c0_i32 : i32
    %1 = arith.extui %0 : i1 to i32
    %c0_i32_0 = arith.constant 0 : i32
    %2 = arith.cmpi ne, %1, %c0_i32_0 : i32
    scf.if %2 {
      %cst_19 = arith.constant 0.000000e+00 : f32
      %41 = vector.broadcast %cst_19 : f32 to vector<1x8x128xf32>
      %c0_20 = arith.constant 0 : index
      %c0_21 = arith.constant 0 : index
      %c0_22 = arith.constant 0 : index
      %42 = vector.load %arg4[%c0_20, %c0_21, %c0_22] : memref<1x8x128xf32, #tpu.memory_space<vmem>>, vector<1x8x128xf32>
      tpu.vector_store %arg4[%c0_20, %c0_21, %c0_22], %41 {strides = array<i32>} : memref<1x8x128xf32, #tpu.memory_space<vmem>>, vector<1x8x128xf32>,
    } else {
    }
    %c0 = arith.constant 0 : index
    %c0_1 = arith.constant 0 : index
    %3 = vector.load %arg2[%c0, %c0_1] : memref<8x32xf32, #tpu.memory_space<vmem>>, vector<8x32xf32>
    %c0_2 = arith.constant 0 : index
    %c0_3 = arith.constant 0 : index
    %4 = vector.load %arg3[%c0_2, %c0_3] : memref<8x1xi32, #tpu.memory_space<vmem>>, vector<8x1xi32>
    %cst = arith.constant dense<0xFF800000> : vector<8xf32>
    %5 = vector.multi_reduction <maximumf>, %3, %cst [1] : vector<8x32xf32> to vector<8xf32>
    %6 = vector.shape_cast %5 : vector<8xf32> to vector<8x1xf32>
    %7 = vector.broadcast %6 : vector<8x1xf32> to vector<8x32xf32>
    %8 = arith.subf %3, %7 : vector<8x32xf32>
    %9 = math.exp %8 : vector<8x32xf32>
    %cst_4 = arith.constant dense<0.000000e+00> : vector<8xf32>
    %10 = vector.multi_reduction <add>, %9, %cst_4 [1] : vector<8x32xf32> to vector<8xf32>
    %11 = vector.shape_cast %10 : vector<8xf32> to vector<8x1xf32>
    %12 = tpu.iota {dimensions = array<i32: 1>} : vector<8x32xi32>
    %13 = vector.broadcast %4 : vector<8x1xi32> to vector<8x32xi32>
    %14 = arith.cmpi eq, %12, %13 : vector<8x32xi32>
    %cst_5 = arith.constant 0.000000e+00 : f32
    %15 = vector.broadcast %cst_5 : f32 to vector<8x32xf32>
    %16 = arith.select %14, %8, %15 : vector<8x32xi1>, vector<8x32xf32>
    %cst_6 = arith.constant dense<0.000000e+00> : vector<8xf32>
    %17 = vector.multi_reduction <add>, %16, %cst_6 [1] : vector<8x32xf32> to vector<8xf32>
    %18 = vector.shape_cast %17 : vector<8xf32> to vector<8x1xf32>
    %19 = math.log %11 : vector<8x1xf32>
    %20 = arith.subf %19, %18 : vector<8x1xf32>
    %cst_7 = arith.constant 0.000000e+00 : f32
    %21 = vector.broadcast %cst_7 : f32 to vector<8x1xf32>
    %22 = arith.subf %21, %20 : vector<8x1xf32>
    %23 = math.exp %22 : vector<8x1xf32>
    %cst_8 = arith.constant 1.000000e+00 : f32
    %24 = vector.broadcast %cst_8 : f32 to vector<8x1xf32>
    %25 = arith.subf %24, %23 : vector<8x1xf32>
    %cst_9 = arith.constant 0.000000e+00 : f32
    %26 = vector.broadcast %cst_9 : f32 to vector<8x1xf32>
    %27 = arith.maximumf %25, %26 : vector<8x1xf32>
    %cst_10 = arith.constant 1.000000e+00 : f32
    %28 = vector.broadcast %cst_10 : f32 to vector<8x1xf32>
    %29 = arith.mulf %28, %27 : vector<8x1xf32>
    %30 = arith.mulf %29, %27 : vector<8x1xf32>
    %cst_11 = arith.constant 1.000000e+00 : f32
    %31 = vector.broadcast %cst_11 : f32 to vector<8x1xf32>
    %32 = arith.mulf %31, %30 : vector<8x1xf32>
    %33 = arith.mulf %32, %20 : vector<8x1xf32>
    %c0_12 = arith.constant 0 : index
    %c0_13 = arith.constant 0 : index
    %c0_14 = arith.constant 0 : index
    %34 = vector.load %arg4[%c0_12, %c0_13, %c0_14] : memref<1x8x128xf32, #tpu.memory_space<vmem>>, vector<1x8x128xf32>
    %cst_15 = arith.constant dense<0.000000e+00> : vector<1xf32>
    %35 = vector.multi_reduction <add>, %33, %cst_15 [0] : vector<8x1xf32> to vector<1xf32>
    %36 = vector.shape_cast %35 : vector<1xf32> to vector<1x1xf32>
    %37 = vector.shape_cast %36 : vector<1x1xf32> to vector<1x1x1xf32>
    %38 = vector.broadcast %37 : vector<1x1x1xf32> to vector<1x8x128xf32>
    %39 = arith.addf %34, %38 : vector<1x8x128xf32>
    %c0_16 = arith.constant 0 : index
    %c0_17 = arith.constant 0 : index
    %c0_18 = arith.constant 0 : index
    %40 = vector.load %arg4[%c0_16, %c0_17, %c0_18] : memref<1x8x128xf32, #tpu.memory_space<vmem>>, vector<1x8x128xf32>
    tpu.vector_store %arg4[%c0_16, %c0_17, %c0_18], %39 {strides = array<i32>} : memref<1x8x128xf32, #tpu.memory_space<vmem>>, vector<1x8x128xf32>,
    return
  }
  func.func @transform_0(%arg0: i32, %arg1: i32) -> (i32, i32) {
    %c1_i32 = arith.constant 1 : i32
    %0 = arith.muli %arg0, %c1_i32 : i32
    %1 = arith.addi %0, %arg1 : i32
    %c0_i32 = arith.constant 0 : i32
    %2 = arith.minsi %1, %c0_i32 : i32
    %c0_i32_0 = arith.constant 0 : i32
    %c0_i32_1 = arith.constant 0 : i32
    return %2, %c0_i32_0 : i32, i32
  }
  func.func @transform_1(%arg0: i32, %arg1: i32) -> (i32, i32) {
    %c1_i32 = arith.constant 1 : i32
    %0 = arith.muli %arg0, %c1_i32 : i32
    %1 = arith.addi %0, %arg1 : i32
    %c0_i32 = arith.constant 0 : i32
    %2 = arith.minsi %1, %c0_i32 : i32
    %c0_i32_0 = arith.constant 0 : i32
    %c0_i32_1 = arith.constant 0 : i32
    return %2, %c0_i32_0 : i32, i32
  }
  func.func @transform_2(%arg0: i32, %arg1: i32) -> (i32, i32, i32) {
    %c0_i32 = arith.constant 0 : i32
    %c0_i32_0 = arith.constant 0 : i32
    %c0_i32_1 = arith.constant 0 : i32
    return %arg0, %c0_i32, %c0_i32_0 : i32, i32, i32
  }
}

</mosaic_0001>

<llo_original>
// kernel: tpu_custom_call.1
$region0: #{tpu_custom_call.1}
  #allocation0 [shape = 'u32[]', space=smem, size = 0x4, offset = 0x4, fixed_abs, tag = 'smem constant byte address 0x4 - core index']
  #allocation1 [shape = 'u32[72,128]{1,0:T(1,128)}', space=vmem, size = 0x9000, scoped, tag = 'internal scratch']
  %s0 = inlined_call_operand.vmem [shape: f32[8,32], index: 0, kind: input, shape index: {}]
  %s1 = inlined_call_operand.vmem [shape: s32[8,1], index: 1, kind: input, shape index: {}]
  %s2 = inlined_call_operand.hbm [shape: f32[1,8,128], index: 2, kind: output, shape index: {}]
  %s3 = sld [smem:[#allocation0]]
  $region22: #{tpu_custom_call.1} parent=0
    _
  %s5 = ssub.s32 1, %s3
  %s6 = scalar_select 0, %s5, %s3
  $region1: #{tpu_custom_call.1} parent=0
    #allocation2 [shape = 'u8[4096]{0}', space=vmem, size = 0x1000, scoped, tag = 'output window, operand 0, single buffered']
    #allocation3 [shape = 's32[1]{0}', space=sflag, size = 0x4, scoped, tag = 'scoped memory for tpu_custom_call.1']
    %7 = vsyncpa [#allocation3], 0
    // Predicated region
    $region2: #{tpu_custom_call.1} parent=1 // pred_check
      _
    $region3: #{tpu_custom_call.1} parent=1 // pred_check_branch
      %9 = sbr.rel (0) target = $region5
    $region4: #{tpu_custom_call.1} parent=1 // pred_region
      %s10 = sadd.s32 0, 0
      %p11 = scmp.lt.s32.totalorder %s10, 0
      %s12 = scalar_select %p11, %s10, 0
      %p13 = scmp.lt.s32.totalorder %s12, 0
      %s14 = scalar_select %p13, %s12, 0
      %s15 = smul.addr %s14, 8
      %s16 = scalar_lea.vmem %s0, %s15
      %s17 = sadd.s32 0, 0
      %p18 = scmp.lt.s32.totalorder %s17, 0
      %s19 = scalar_select %p18, %s17, 0
    $region5: #{tpu_custom_call.1} parent=1 // pred_fallthru
      _
    // Predicated region
    $region6: #{tpu_custom_call.1} parent=1 // pred_check
      _
    $region7: #{tpu_custom_call.1} parent=1 // pred_check_branch
      %21 = sbr.rel (0) target = $region9
    $region8: #{tpu_custom_call.1} parent=1 // pred_region
      %s22 = sadd.s32 0, 0
      %p23 = scmp.lt.s32.totalorder %s22, 0
      %s24 = scalar_select %p23, %s22, 0
      %p25 = scmp.lt.s32.totalorder %s24, 0
      %s26 = scalar_select %p25, %s24, 0
      %s27 = smul.addr %s26, 8
      %s28 = scalar_lea.vmem %s1, %s27
      %s29 = sadd.s32 0, 0
      %p30 = scmp.lt.s32.totalorder %s29, 0
      %s31 = scalar_select %p30, %s29, 0
    $region9: #{tpu_custom_call.1} parent=1 // pred_fallthru
      _
    %s32 = sadd.s32 0, 0
    %p33 = scmp.lt.s32.totalorder %s32, 0
    %s34 = scalar_select %p33, %s32, 0
    %p35 = scmp.lt.s32.totalorder %s34, 0
    %s36 = scalar_select %p35, %s34, 0
    %s37 = smul.addr %s36, 8
    %s38 = scalar_lea.vmem %s0, %s37
    %s39 = sadd.s32 0, 0
    %p40 = scmp.lt.s32.totalorder %s39, 0
    %s41 = scalar_select %p40, %s39, 0
    %p42 = scmp.lt.s32.totalorder %s41, 0
    %s43 = scalar_select %p42, %s41, 0
    %s44 = smul.addr %s43, 8
    %s45 = scalar_lea.vmem %s1, %s44
    %s46 = sadd.s32 0, 0
    %p47 = scmp.lt.s32.totalorder %s46, 0
    %s48 = scalar_select %p47, %s46, 0
    %p49 = scmp.lt.s32.totalorder %s48, 0
    %s50 = scalar_select %p49, %s48, 0
    %s51 = smul.addr %s50, 8
    %s52 = scalar_lea.vmem %s0, %s51
    %s53 = sadd.s32 0, 0
    %p54 = scmp.lt.s32.totalorder %s53, 0
    %s55 = scalar_select %p54, %s53, 0
    %s56 = sadd.s32 0, 0
    %p57 = scmp.lt.s32.totalorder %s56, 0
    %s58 = scalar_select %p57, %s56, 0
    %p59 = scmp.lt.s32.totalorder %s58, 0
    %s60 = scalar_select %p59, %s58, 0
    %s61 = smul.addr %s60, 8
    %s62 = scalar_lea.vmem %s1, %s61
    %s63 = sadd.s32 0, 0
    %p64 = scmp.lt.s32.totalorder %s63, 0
    %s65 = scalar_select %p64, %s63, 0
    %p66 = scmp.eq.s32.totalorder 0, 0
    // Predicated region
    $region10: #{tpu_custom_call.1} parent=1 // pred_check
      %p67 = pneg %p66
    $region11: #{tpu_custom_call.1} parent=1 // pred_check_branch
      %69 = sbr.rel (%p67) target = $region13
    $region12: #{tpu_custom_call.1} parent=1 // pred_region
      %70 = vst [vmem:[#allocation2] sm:$0xff] 0.0
    $region13: #{tpu_custom_call.1} parent=1 // pred_fallthru
      _
    %v71 = vld [vmem:[%s52] sm:$0xff]
    %v72 = vld [vmem:[%s62] sm:$0xff]
    %vm73 = vcmask 261120
    %v74 = vsel %vm73, %v71, -inf
    %75 = vmax.xlane.f32.xlu0 %v74
    %v76 = vpop.xlane.xlu0 %75
    %v77 = vsub.f32 %v71, %v76
    %v78 = vmul.f32 %v77, 1.442695
    %v79 = vpow.pop %v78
    %v80 = vsel %vm73, %v79, 0.0
    %81 = vadd.xlane.f32.xlu0 %v80
    %v82 = vpop.xlane.xlu0 %81
    %v83 = vlaneseq
    %v84 = vand.u32 %v83, 127
    %85 = vset.pattern.permute.xlu0 0
    %86 = vperm.xlu0 %85, %v72
    %v87 = vpop.permute.xlu0 %86
    %vm88 = vcmp.eq.s32.totalorder %v84, %v87
    %v89 = vsel %vm88, %v77, 0.0
    %v90 = vsel %vm73, %v89, 0.0
    %91 = vadd.xlane.f32.xlu0 %v90
    %v92 = vpop.xlane.xlu0 %91
    %v93 = vlog2.pop %v82
    %v94 = vmul.f32 %v93, 0.6931472
    %v95 = vsub.f32 %v94, %v92
    %v96 = vsub.f32 0.0, %v95
    %v97 = vmul.f32 %v96, 1.442695
    %v98 = vpow.pop %v97
    %v99 = vsub.f32 1.0, %v98
    %v100 = vmax.f32 %v99, 0.0
    %v101 = vmul.f32 %v100, %v100
    %v102 = vmul.f32 %v101, %v95
    %v103 = vld [vmem:[#allocation2] sm:$0xff]
    %v104 = vrot.slane %v102, 4
    %v105 = vadd.f32 %v102, %v104
    %v106 = vrot.slane %v105, 2
    %v107 = vadd.f32 %v105, %v106
    %v108 = vrot.slane %v107, 1
    %v109 = vadd.f32 %v107, %v108
    %v110 = vadd.f32 %v103, %v109
    %111 = vst [vmem:[#allocation2] sm:$0xff] %v110
    // Predicated region
    $region14: #{tpu_custom_call.1} parent=1 // pred_check
      _
    $region15: #{tpu_custom_call.1} parent=1 // pred_check_branch
      %113 = sbr.rel (0) target = $region17
    $region16: #{tpu_custom_call.1} parent=1 // pred_region
      %115 = vsyncadd [#allocation3], 0
      %s117 = sshll.u32 [#allocation2], 4
      %s118 = int_to_ptr.vmem [resolvable:$true] %s117
      %s119 = sshll.u32 %s2, 4
      %s120 = int_to_ptr.hbm [resolvable:$true] %s119
      %122 = dma.vmem_to_hbm [thread:$0]  %s118, 128, %s120, [#allocation3]
    $region17: #{tpu_custom_call.1} parent=1 // pred_fallthru
      _
    // Predicated region
    $region18: #{tpu_custom_call.1} parent=1 // pred_check
      _
    $region19: #{tpu_custom_call.1} parent=1 // pred_check_branch
      %124 = sbr.rel (0) target = $region21
    $region20: #{tpu_custom_call.1} parent=1 // pred_region
      %126 = dma.done [#allocation3], 128
    $region21: #{tpu_custom_call.1} parent=1 // pred_fallthru
      _
    %127 = vsyncpa [#allocation3], 1

</llo_original>
